<compile_context>
chip_gen: v7x
topology: tpu7x:2x2x1
jax: 0.10.0
libtpu: 0.0.40
codegen_flags: <defaults>
</compile_context>

<pallas_src>
import jax
import jax.numpy as jnp
from jax.experimental import pallas as pl
from jax.experimental.pallas import tpu as pltpu


def _round_up(x: int, m: int) -> int:
    return ((x + m - 1) // m) * m


def _interp_matrix(out_size: int, in_size: int) -> jnp.ndarray:
    """Row interpolation matrix M (out_size, in_size) such that `M @ x` reproduces
    torch.nn.functional.interpolate(mode='bilinear', align_corners=False) along one axis."""
    scale = in_size / out_size
    i = jnp.arange(out_size, dtype=jnp.float32)
    src = jnp.maximum((i + 0.5) * scale - 0.5, 0.0)          # half-pixel, clamp-at-0 (torch)
    i0 = jnp.floor(src).astype(jnp.int32)
    i1 = jnp.minimum(i0 + 1, in_size - 1)
    w1 = src - i0.astype(jnp.float32)
    w0 = 1.0 - w1
    return (jax.nn.one_hot(i0, in_size, dtype=jnp.float32) * w0[:, None]
            + jax.nn.one_hot(i1, in_size, dtype=jnp.float32) * w1[:, None])


# ----------------------------------------------------------------------------
# Kernel 1: fold the interpolation matrices into the gradient map and compute
# sum(G) in the same HBM pass.
#   Gp    = A^T @ G @ B   (accumulated over H tiles, grid axis "arbitrary")
#   g_sum = sum(G)        (XLU reduce, overlaps the MXU matmuls)
# ----------------------------------------------------------------------------
def _fold_kernel(g_ref, b_ref, at_ref, gp_ref, gs_ref):
    @pl.when(pl.program_id(0) == 0)
    def _():
        gp_ref[...] = jnp.zeros_like(gp_ref)
        gs_ref[...] = jnp.zeros_like(gs_ref)

    g = g_ref[...]                                                        # (th, W)
    tmp = jnp.dot(g, b_ref[...], preferred_element_type=jnp.float32)     # (th, w) small
    gp_ref[...] += jnp.dot(at_ref[...], tmp,
                           preferred_element_type=jnp.float32)           # (h, w)
    gs_ref[...] += jnp.sum(g)                                            # cross-lane reduce


def _fold_gradient_map(a: jnp.ndarray, b: jnp.ndarray, g2d: jnp.ndarray,
                       tile_h: int = 256):
    H, h = a.shape
    W, w = b.shape
    at = a.T                                               # (h, H)

    if H <= tile_h:
        th, hpad = H, H
    else:
        th = tile_h                                        # multiple of 128 -> valid lane dim
        hpad = _round_up(H, th)
    if hpad != H:                                          # zero-padded rows contribute nothing
        at = jnp.pad(at, ((0, 0), (0, hpad - H)))
        g2d = jnp.pad(g2d, ((0, hpad - H), (0, 0)))
    n_tiles = hpad // th

    cost = pl.CostEstimate(
        flops=2 * hpad * W * w + 2 * hpad * h * w,
        transcendentals=0,
        bytes_accessed=4 * (h * hpad + hpad * W + W * w + h * w + 1),
    )
    gp, gs = pl.pallas_call(
        _fold_kernel,
        out_shape=(jax.ShapeDtypeStruct((h, w), jnp.float32),
                   jax.ShapeDtypeStruct((1, 1), jnp.float32)),
        grid_spec=pltpu.PrefetchScalarGridSpec(
            num_scalar_prefetch=0,
            grid=(n_tiles,),
            in_specs=[
                pl.BlockSpec((th, W), lambda t: (t, 0)),   # gradient-map tile (streamed)
                pl.BlockSpec((W, w), lambda t: (0, 0)),    # B, resident
                pl.BlockSpec((h, th), lambda t: (0, t)),   # A^T tile
            ],
            out_specs=[pl.BlockSpec((h, w), lambda t: (0, 0)),    # Gp accumulator
                       pl.BlockSpec((1, 1), lambda t: (0, 0))],   # sum(G) accumulator
        ),
        compiler_params=pltpu.CompilerParams(dimension_semantics=("arbitrary",)),
        cost_estimate=cost,
    )(g2d, b, at)
    return gp, gs[0, 0]


# ----------------------------------------------------------------------------
# Kernel 2: streaming numerator = sum_n sum(M_n * Gp).
#   Masks arrive lane-dense as (N_pad, h*w), block_m masks per grid step.
#   Per-step work is a pure VPU add into a VMEM accumulator; one cross-lane
#   reduce against Gp per chunk in the final pl.when.  Leading grid axis is
#   "parallel" (one partial numerator per chunk → both v7x TensorCores usable).
# ----------------------------------------------------------------------------
def _mask_reduce_kernel(m_ref, gp_ref, out_ref, acc_ref):
    b = pl.program_id(1)

    @pl.when(b == 0)
    def _():
        acc_ref[...] = jnp.zeros_like(acc_ref)

    acc_ref[...] += m_ref[...]                       # (block_m, h*w) elementwise adds

    @pl.when(b == pl.num_programs(1) - 1)
    def _():
        num = jnp.sum(acc_ref[...] * gp_ref[...])    # single cross-lane reduce per chunk
        out_ref[...] = jnp.zeros_like(out_ref) + num


def _mask_numerator(masks_flat: jnp.ndarray, gp_flat: jnp.ndarray,
                    *, target_block_bytes: int = 1 << 20) -> jnp.ndarray:
    n, hw = masks_flat.shape

    # ~1 MiB of mask rows per grid step (8-row f32 sublane granularity), capped
    # by N so small workloads don't over-pad; double-buffered input + scratch
    # stays well inside scoped VMEM.
    block_m = max(8, min(512, (target_block_bytes // (4 * hw)) // 8 * 8))
    block_m = min(block_m, _round_up(max(n, 1), 8))
    # Two "parallel" chunks (megacore) only when each chunk gets >= 2 blocks.
    n_chunks = 2 if n >= 4 * block_m else 1

    npad = _round_up(max(n, 1), n_chunks * block_m)
    if npad != n:                                    # zero-padded masks contribute 0
        masks_flat = jnp.pad(masks_flat, ((0, npad - n), (0, 0)))
    blocks_per_chunk = npad // (n_chunks * block_m)

    cost = pl.CostEstimate(
        flops=2 * npad * hw,
        transcendentals=0,
        bytes_accessed=4 * (npad * hw + hw + n_chunks),
    )
    partial = pl.pallas_call(
        _mask_reduce_kernel,
        out_shape=jax.ShapeDtypeStruct((n_chunks, 1, 1), jnp.float32),
        grid_spec=pltpu.PrefetchScalarGridSpec(
            num_scalar_prefetch=0,
            grid=(n_chunks, blocks_per_chunk),
            in_specs=[
                pl.BlockSpec((block_m, hw),
                             lambda c, b: (c * blocks_per_chunk + b, 0)),  # mask slab
                pl.BlockSpec((1, hw), lambda c, b: (0, 0)),                # Gp, resident
            ],
            out_specs=pl.BlockSpec((1, 1, 1), lambda c, b: (c, 0, 0)),     # per-chunk partial
            scratch_shapes=[pltpu.VMEM((block_m, hw), jnp.float32)],
        ),
        compiler_params=pltpu.CompilerParams(
            dimension_semantics=("parallel", "arbitrary")),
        cost_estimate=cost,
    )(masks_flat, gp_flat)
    return jnp.sum(partial)


def lava_loss(seg_masks: jnp.ndarray, gradient_map: jnp.ndarray) -> jnp.ndarray:
    n, h, w = seg_masks.shape
    gh, gw = gradient_map.shape[-2], gradient_map.shape[-1]

    a = _interp_matrix(gh, h)                        # (H, h)
    b = _interp_matrix(gw, w)                        # (W, w)
    g2d = gradient_map.reshape(gh, gw).astype(jnp.float32)

    # sum_n sum((A @ M_n @ B^T) * G) == sum_n sum(M_n * (A^T @ G @ B));
    # gradient map is read from HBM exactly once (Gp and sum(G) in one pass).
    gp, g_sum = _fold_gradient_map(a, b, g2d)        # (h, w), scalar

    masks_flat = seg_masks.astype(jnp.float32).reshape(n, h * w)   # lane-dense layout
    gp_flat = gp.reshape(1, h * w)

    numerator = _mask_numerator(masks_flat, gp_flat)

    # Denominator uses the true N (padding-safe).
    return numerator / (g_sum * n)


if __name__ == "__main__":
    key = jax.random.PRNGKey(0)
    k1, k2, k3, k4 = jax.random.split(key, 4)

    def reference(seg_masks, gradient_map):
        # Pure-JAX reference via the same separable-bilinear weights as torch
        # bilinear interpolation with align_corners=False.
        n, h, w = seg_masks.shape
        gh, gw = gradient_map.shape[-2], gradient_map.shape[-1]
        a_ref = _interp_matrix(gh, h)
        b_ref = _interp_matrix(gw, w)
        up = jnp.einsum("Hh,nhw,Ww->nHW", a_ref, seg_masks, b_ref)
        return jnp.sum(up * gradient_map) / (jnp.sum(gradient_map) * n)

    # N=4 instance masks at 16x16, gradient map at GT resolution 32x32.
    seg_masks = jax.random.uniform(k1, (4, 16, 16), dtype=jnp.float32)
    gradient_map = jax.random.uniform(k2, (1, 32, 32), dtype=jnp.float32)
    loss = lava_loss(seg_masks, gradient_map)
    jax.block_until_ready(loss)
    ref = reference(seg_masks, gradient_map)
    assert jnp.allclose(loss, ref, rtol=1e-4, atol=1e-5), (loss, ref)

    # Odd, non-aligned shapes: exercises N-padding and non-128-multiple lanes.
    seg_masks2 = jax.random.uniform(k3, (5, 24, 20), dtype=jnp.float32)
    gradient_map2 = jax.random.uniform(k4, (1, 97, 67), dtype=jnp.float32)
    loss2 = lava_loss(seg_masks2, gradient_map2)
    jax.block_until_ready(loss2)
    ref2 = reference(seg_masks2, gradient_map2)
    assert jnp.allclose(loss2, ref2, rtol=1e-3, atol=1e-5), (loss2, ref2)

    print("KERNEL_OK")
</pallas_src>

<mosaic_0001>
module attributes {stable_mosaic.version = 11 : i64} {
  func.func @_fold_kernel(%arg0: i32, %arg1: memref<32x32xf32, #tpu.memory_space<vmem>>, %arg2: memref<32x16xf32, #tpu.memory_space<vmem>>, %arg3: memref<16x32xf32, #tpu.memory_space<vmem>>, %arg4: memref<16x16xf32, #tpu.memory_space<vmem>>, %arg5: memref<1x1xf32, #tpu.memory_space<vmem>>) attributes {dimension_semantics = [#tpu.dimension_semantics<arbitrary>], iteration_bounds = array<i64: 1>, scalar_prefetch = 0 : i64, scratch_operands = 0 : i64, tpu.core_type = #tpu.core_type<tc>, window_params = [{transform_indices = @transform_0, window_bounds = array<i64: 32, 32>}, {pipeline_mode = #tpu.pipeline_mode<synchronous>, transform_indices = @transform_1, window_bounds = array<i64: 32, 16>}, {transform_indices = @transform_2, window_bounds = array<i64: 16, 32>}, {pipeline_mode = #tpu.pipeline_mode<synchronous>, transform_indices = @transform_3, window_bounds = array<i64: 16, 16>}, {pipeline_mode = #tpu.pipeline_mode<synchronous>, transform_indices = @transform_4, window_bounds = array<i64: 1, 1>}]} {
    %c0_i32 = arith.constant 0 : i32
    %0 = arith.cmpi eq, %arg0, %c0_i32 : i32
    %1 = arith.extui %0 : i1 to i32
    %c0_i32_0 = arith.constant 0 : i32
    %2 = arith.cmpi ne, %1, %c0_i32_0 : i32
    scf.if %2 {
      %cst_16 = arith.constant 0.000000e+00 : f32
      %19 = vector.broadcast %cst_16 : f32 to vector<16x16xf32>
      %c0_17 = arith.constant 0 : index
      %c0_18 = arith.constant 0 : index
      %20 = vector.load %arg4[%c0_17, %c0_18] : memref<16x16xf32, #tpu.memory_space<vmem>>, vector<16x16xf32>
      tpu.vector_store %arg4[%c0_17, %c0_18], %19 {strides = array<i32>} : memref<16x16xf32, #tpu.memory_space<vmem>>, vector<16x16xf32>,
      %cst_19 = arith.constant 0.000000e+00 : f32
      %21 = vector.broadcast %cst_19 : f32 to vector<1x1xf32>
      %c0_20 = arith.constant 0 : index
      %c0_21 = arith.constant 0 : index
      %22 = vector.load %arg5[%c0_20, %c0_21] : memref<1x1xf32, #tpu.memory_space<vmem>>, vector<1x1xf32>
      tpu.vector_store %arg5[%c0_20, %c0_21], %21 {strides = array<i32>} : memref<1x1xf32, #tpu.memory_space<vmem>>, vector<1x1xf32>,
    } else {
    }
    %c0 = arith.constant 0 : index
    %c0_1 = arith.constant 0 : index
    %3 = vector.load %arg1[%c0, %c0_1] : memref<32x32xf32, #tpu.memory_space<vmem>>, vector<32x32xf32>
    %c0_2 = arith.constant 0 : index
    %c0_3 = arith.constant 0 : index
    %4 = vector.load %arg2[%c0_2, %c0_3] : memref<32x16xf32, #tpu.memory_space<vmem>>, vector<32x16xf32>
    %cst = arith.constant dense<0.000000e+00> : vector<32x16xf32>
    %5 = tpu.matmul %3, %4, %cst {dimension_numbers = #tpu.dot_dimension_numbers<[1], [0], [0], [1], [0, 0, 1, 1], [], []>} : vector<32x32xf32>, vector<32x16xf32>, vector<32x16xf32> -> vector<32x16xf32>
    %c0_4 = arith.constant 0 : index
    %c0_5 = arith.constant 0 : index
    %6 = vector.load %arg4[%c0_4, %c0_5] : memref<16x16xf32, #tpu.memory_space<vmem>>, vector<16x16xf32>
    %c0_6 = arith.constant 0 : index
    %c0_7 = arith.constant 0 : index
    %7 = vector.load %arg3[%c0_6, %c0_7] : memref<16x32xf32, #tpu.memory_space<vmem>>, vector<16x32xf32>
    %cst_8 = arith.constant dense<0.000000e+00> : vector<16x16xf32>
    %8 = tpu.matmul %7, %5, %cst_8 {dimension_numbers = #tpu.dot_dimension_numbers<[1], [0], [0], [1], [0, 0, 1, 1], [], []>} : vector<16x32xf32>, vector<32x16xf32>, vector<16x16xf32> -> vector<16x16xf32>
    %9 = arith.addf %6, %8 : vector<16x16xf32>
    %c0_9 = arith.constant 0 : index
    %c0_10 = arith.constant 0 : index
    %10 = vector.load %arg4[%c0_9, %c0_10] : memref<16x16xf32, #tpu.memory_space<vmem>>, vector<16x16xf32>
    tpu.vector_store %arg4[%c0_9, %c0_10], %9 {strides = array<i32>} : memref<16x16xf32, #tpu.memory_space<vmem>>, vector<16x16xf32>,
    %c0_11 = arith.constant 0 : index
    %c0_12 = arith.constant 0 : index
    %11 = vector.load %arg5[%c0_11, %c0_12] : memref<1x1xf32, #tpu.memory_space<vmem>>, vector<1x1xf32>
    %12 = vector.shape_cast %3 : vector<32x32xf32> to vector<1x32x32xf32>
    %cst_13 = arith.constant dense<0.000000e+00> : vector<1xf32>
    %13 = vector.multi_reduction <add>, %12, %cst_13 [1, 2] : vector<1x32x32xf32> to vector<1xf32>
    %14 = vector.shape_cast %13 : vector<1xf32> to vector<1x1x1xf32>
    %15 = vector.extract %14[0, 0, 0] : f32 from vector<1x1x1xf32>
    %16 = vector.broadcast %15 : f32 to vector<1x1xf32>
    %17 = arith.addf %11, %16 : vector<1x1xf32>
    %c0_14 = arith.constant 0 : index
    %c0_15 = arith.constant 0 : index
    %18 = vector.load %arg5[%c0_14, %c0_15] : memref<1x1xf32, #tpu.memory_space<vmem>>, vector<1x1xf32>
    tpu.vector_store %arg5[%c0_14, %c0_15], %17 {strides = array<i32>} : memref<1x1xf32, #tpu.memory_space<vmem>>, vector<1x1xf32>,
    return
  }
  func.func @transform_0(%arg0: i32) -> (i32, i32) {
    %c0_i32 = arith.constant 0 : i32
    %c0_i32_0 = arith.constant 0 : i32
    return %arg0, %c0_i32 : i32, i32
  }
  func.func @transform_1(%arg0: i32) -> (i32, i32) {
    %c0_i32 = arith.constant 0 : i32
    %c0_i32_0 = arith.constant 0 : i32
    %c0_i32_1 = arith.constant 0 : i32
    return %c0_i32, %c0_i32_0 : i32, i32
  }
  func.func @transform_2(%arg0: i32) -> (i32, i32) {
    %c0_i32 = arith.constant 0 : i32
    %c0_i32_0 = arith.constant 0 : i32
    return %c0_i32, %arg0 : i32, i32
  }
  func.func @transform_3(%arg0: i32) -> (i32, i32) {
    %c0_i32 = arith.constant 0 : i32
    %c0_i32_0 = arith.constant 0 : i32
    %c0_i32_1 = arith.constant 0 : i32
    return %c0_i32, %c0_i32_0 : i32, i32
  }
  func.func @transform_4(%arg0: i32) -> (i32, i32) {
    %c0_i32 = arith.constant 0 : i32
    %c0_i32_0 = arith.constant 0 : i32
    %c0_i32_1 = arith.constant 0 : i32
    return %c0_i32, %c0_i32_0 : i32, i32
  }
}

</mosaic_0001>

<llo_original>
// kernel: tpu_custom_call.1
$region0: #{tpu_custom_call.1}
  #allocation0 [shape = 'u32[]', space=smem, size = 0x4, offset = 0x4, fixed_abs, tag = 'smem constant byte address 0x4 - core index']
  #allocation1 [shape = 'u32[144,128]{1,0:T(1,128)}', space=vmem, size = 0x12000, scoped, tag = 'internal scratch']
  %s0 = inlined_call_operand.vmem [shape: f32[32,32], index: 0, kind: input, shape index: {}]
  %s1 = inlined_call_operand.vmem [shape: f32[32,16], index: 1, kind: input, shape index: {}]
  %s2 = inlined_call_operand.vmem [shape: f32[16,32], index: 2, kind: input, shape index: {}]
  %s3 = inlined_call_operand.hbm [shape: f32[16,16], index: 3, kind: output, shape index: {0}]
  %s4 = inlined_call_operand.hbm [shape: f32[1,1], index: 4, kind: output, shape index: {1}]
  %5 = xla_tuple %s3, %s4
  %s6 = sld [smem:[#allocation0]]
  $region34: #{tpu_custom_call.1} parent=0
    _
  %s8 = ssub.s32 1, %s6
  %s9 = scalar_select 0, %s8, %s6
  $region1: #{tpu_custom_call.1} parent=0
    #allocation2 [shape = 'u8[8192]{0}', space=vmem, size = 0x2000, scoped, tag = 'output window, operand 0, single buffered']
    #allocation3 [shape = 's32[1]{0}', space=sflag, size = 0x4, scoped, tag = 'scoped memory for tpu_custom_call.1']
    #allocation4 [shape = 'u8[512]{0}', space=vmem, size = 0x400, scoped, tag = 'output window, operand 1, single buffered']
    #allocation5 [shape = 's32[1]{0}', space=sflag, size = 0x4, scoped, tag = 'scoped memory for tpu_custom_call.1']
    %10 = vsyncpa [#allocation3], 0
    %11 = vsyncpa [#allocation5], 0
    // Predicated region
    $region2: #{tpu_custom_call.1} parent=1 // pred_check
      _
    $region3: #{tpu_custom_call.1} parent=1 // pred_check_branch
      %13 = sbr.rel (0) target = $region5
    $region4: #{tpu_custom_call.1} parent=1 // pred_region
      _
    $region5: #{tpu_custom_call.1} parent=1 // pred_fallthru
      _
    // Predicated region
    $region6: #{tpu_custom_call.1} parent=1 // pred_check
      _
    $region7: #{tpu_custom_call.1} parent=1 // pred_check_branch
      %15 = sbr.rel (0) target = $region9
    $region8: #{tpu_custom_call.1} parent=1 // pred_region
      _
    $region9: #{tpu_custom_call.1} parent=1 // pred_fallthru
      _
    // Predicated region
    $region10: #{tpu_custom_call.1} parent=1 // pred_check
      _
    $region11: #{tpu_custom_call.1} parent=1 // pred_check_branch
      %17 = sbr.rel (0) target = $region13
    $region12: #{tpu_custom_call.1} parent=1 // pred_region
      _
    $region13: #{tpu_custom_call.1} parent=1 // pred_fallthru
      _
    %p18 = scmp.eq.s32.totalorder 0, 0
    // Predicated region
    $region14: #{tpu_custom_call.1} parent=1 // pred_check
      %p19 = pneg %p18
    $region15: #{tpu_custom_call.1} parent=1 // pred_check_branch
      %21 = sbr.rel (%p19) target = $region17
    $region16: #{tpu_custom_call.1} parent=1 // pred_region
      %vm22 = vcmask 130048
      %23 = vst.msk [vmem:[#allocation2] sm:$0xff] %vm22, 0.0
      %24 = vst.msk [vmem:[#allocation2 + $0x8] sm:$0xff] %vm22, 0.0
      %vm25 = vcmask 0
      %26 = vst.msk [vmem:[#allocation4] sm:$0x1] %vm25, 0.0
    $region17: #{tpu_custom_call.1} parent=1 // pred_fallthru
      _
    %v27 = vld [vmem:[%s0] sm:$0xff]
    %v28 = vld [vmem:[%s0 + $0x8] sm:$0xff]
    %v29 = vld [vmem:[%s0 + $0x10] sm:$0xff]
    %v30 = vld [vmem:[%s0 + $0x18] sm:$0xff]
    %v31 = vld [vmem:[%s1] sm:$0xff]
    %v32 = vld [vmem:[%s1 + $0x8] sm:$0xff]
    %v33 = vld [vmem:[%s1 + $0x10] sm:$0xff]
    %v34 = vld [vmem:[%s1 + $0x18] sm:$0xff]
    %vm35 = vcmask 261120
    %v37 = vsel %vm35, %v27, 0
    %v40 = vsel %vm35, %v28, 0
    %v43 = vsel %vm35, %v29, 0
    %v46 = vsel %vm35, %v30, 0
    %48 = vmatprep.subr.mxu0 0.0
    %49 = vmatpush1.msra.mxu0 %v31
    %50 = vmatprep.subr.mxu0 0.0
    %51 = vmatpush1.msra.mxu0 %v32
    %52 = vmatprep.subr.mxu0 0.0
    %53 = vmatpush1.msra.mxu0 %v33
    %54 = vmatprep.subr.mxu0 0.0
    %55 = vmatpush1.msra.mxu0 %v34
    %56 = vmatprep.subr.mxu0 0.0
    %57 = vmatpush1.msra.mxu0 0.0
    %58 = vmatprep.subr.mxu0 0.0
    %59 = vmatpush1.msra.mxu0 0.0
    %60 = vmatprep.subr.mxu0 0.0
    %61 = vmatpush1.msra.mxu0 0.0
    %62 = vmatprep.subr.mxu0 0.0
    %63 = vmatpush1.msra.mxu0 0.0
    %64 = vmatprep.subr.mxu0 0.0
    %65 = vmatpush1.msra.mxu0 0.0
    %66 = vmatprep.subr.mxu0 0.0
    %67 = vmatpush1.msra.mxu0 0.0
    %68 = vmatprep.subr.mxu0 0.0
    %69 = vmatpush1.msra.mxu0 0.0
    %70 = vmatprep.subr.mxu0 0.0
    %71 = vmatpush1.msra.mxu0 0.0
    %72 = vmatprep.subr.mxu0 0.0
    %73 = vmatpush1.msra.mxu0 0.0
    %74 = vmatprep.subr.mxu0 0.0
    %75 = vmatpush1.msra.mxu0 0.0
    %76 = vmatprep.subr.mxu0 0.0
    %77 = vmatpush1.msra.mxu0 0.0
    %78 = vmatprep.subr.mxu0 0.0
    %79 = vmatpush1.msra.mxu0 0.0
    %80 = vmatprep.subr.mxu0 0.0
    %81 = vmatpush1.msra.mxu0 0.0
    %82 = vmatprep.subr.mxu0 0.0
    %83 = vmatpush1.msra.mxu0 0.0
    %84 = vmatprep.subr.mxu0 0.0
    %85 = vmatpush1.msra.mxu0 0.0
    %86 = vmatprep.subr.mxu0 0.0
    %87 = vmatpush1.msra.mxu0 0.0
    %88 = vmatprep.subr.mxu0 0.0
    %89 = vmatpush1.msra.mxu0 0.0
    %90 = vmatprep.subr.mxu0 0.0
    %91 = vmatpush1.msra.mxu0 0.0
    %92 = vmatprep.subr.mxu0 0.0
    %93 = vmatpush1.msra.mxu0 0.0
    %94 = vmatprep.subr.mxu0 0.0
    %95 = vmatpush1.msra.mxu0 0.0
    %96 = vmatprep.subr.mxu0 0.0
    %97 = vmatpush1.msra.mxu0 0.0
    %98 = vmatprep.subr.mxu0 0.0
    %99 = vmatpush1.msra.mxu0 0.0
    %100 = vmatprep.subr.mxu0 0.0
    %101 = vmatpush1.msra.mxu0 0.0
    %102 = vmatprep.subr.mxu0 0.0
    %103 = vmatpush1.msra.mxu0 0.0
    %104 = vmatprep.subr.mxu0 0.0
    %105 = vmatpush1.msra.mxu0 0.0
    %106 = vmatprep.subr.mxu0 0.0
    %107 = vmatpush1.msra.mxu0 0.0
    %108 = vmatprep.subr.mxu0 0.0
    %109 = vmatpush1.msra.mxu0 0.0
    %110 = vmatprep.subr.mxu0 0.0
    %111 = vmatpush1.msra.mxu0 0.0
    %112 = vmatprep.mubr.f32.mxu0 0.0
    %113 = vmatmul.mubr.f32.gmra.mrb[0].mxu0 %v37
    %v114 = vpop.f32.mrb[0].mxu0
    %v115 = vadd.f32 0.0, %v114
    %v116 = vpop.f32.mrb[0].mxu0
    %117 = vmatprep.mubr.f32.mxu0 0.0
    %118 = vmatmul.mubr.f32.gmra.mrb[0].mxu0 %v40
    %v119 = vpop.f32.mrb[0].mxu0
    %v120 = vadd.f32 0.0, %v119
    %v121 = vpop.f32.mrb[0].mxu0
    %122 = vmatprep.mubr.f32.mxu0 0.0
    %123 = vmatmul.mubr.f32.gmra.mrb[0].mxu0 %v43
    %v124 = vpop.f32.mrb[0].mxu0
    %v125 = vadd.f32 0.0, %v124
    %v126 = vpop.f32.mrb[0].mxu0
    %127 = vmatprep.mubr.f32.mxu0 0.0
    %128 = vmatmul.mubr.f32.gmra.mrb[0].mxu0 %v46
    %v129 = vpop.f32.mrb[0].mxu0
    %v130 = vadd.f32 0.0, %v129
    %v131 = vpop.f32.mrb[0].mxu0
    %132 = vdwg.mxu0
    %v133 = vld [vmem:[#allocation2] sm:$0xff]
    %v134 = vld [vmem:[#allocation2 + $0x8] sm:$0xff]
    %v135 = vld [vmem:[%s2] sm:$0xff]
    %v136 = vld [vmem:[%s2 + $0x8] sm:$0xff]
    %v138 = vsel %vm35, %v135, 0
    %v141 = vsel %vm35, %v136, 0
    %143 = vmatprep.subr.mxu0 0.0
    %144 = vmatpush1.msra.mxu0 %v115
    %145 = vmatprep.subr.mxu0 0.0
    %146 = vmatpush1.msra.mxu0 %v120
    %147 = vmatprep.subr.mxu0 0.0
    %148 = vmatpush1.msra.mxu0 %v125
    %149 = vmatprep.subr.mxu0 0.0
    %150 = vmatpush1.msra.mxu0 %v130
    %151 = vmatprep.subr.mxu0 0.0
    %152 = vmatpush1.msra.mxu0 0.0
    %153 = vmatprep.subr.mxu0 0.0
    %154 = vmatpush1.msra.mxu0 0.0
    %155 = vmatprep.subr.mxu0 0.0
    %156 = vmatpush1.msra.mxu0 0.0
    %157 = vmatprep.subr.mxu0 0.0
    %158 = vmatpush1.msra.mxu0 0.0
    %159 = vmatprep.subr.mxu0 0.0
    %160 = vmatpush1.msra.mxu0 0.0
    %161 = vmatprep.subr.mxu0 0.0
    %162 = vmatpush1.msra.mxu0 0.0
    %163 = vmatprep.subr.mxu0 0.0
    %164 = vmatpush1.msra.mxu0 0.0
    %165 = vmatprep.subr.mxu0 0.0
    %166 = vmatpush1.msra.mxu0 0.0
    %167 = vmatprep.subr.mxu0 0.0
    %168 = vmatpush1.msra.mxu0 0.0
    %169 = vmatprep.subr.mxu0 0.0
    %170 = vmatpush1.msra.mxu0 0.0
    %171 = vmatprep.subr.mxu0 0.0
    %172 = vmatpush1.msra.mxu0 0.0
    %173 = vmatprep.subr.mxu0 0.0
    %174 = vmatpush1.msra.mxu0 0.0
    %175 = vmatprep.subr.mxu0 0.0
    %176 = vmatpush1.msra.mxu0 0.0
    %177 = vmatprep.subr.mxu0 0.0
    %178 = vmatpush1.msra.mxu0 0.0
    %179 = vmatprep.subr.mxu0 0.0
    %180 = vmatpush1.msra.mxu0 0.0
    %181 = vmatprep.subr.mxu0 0.0
    %182 = vmatpush1.msra.mxu0 0.0
    %183 = vmatprep.subr.mxu0 0.0
    %184 = vmatpush1.msra.mxu0 0.0
    %185 = vmatprep.subr.mxu0 0.0
    %186 = vmatpush1.msra.mxu0 0.0
    %187 = vmatprep.subr.mxu0 0.0
    %188 = vmatpush1.msra.mxu0 0.0
    %189 = vmatprep.subr.mxu0 0.0
    %190 = vmatpush1.msra.mxu0 0.0
    %191 = vmatprep.subr.mxu0 0.0
    %192 = vmatpush1.msra.mxu0 0.0
    %193 = vmatprep.subr.mxu0 0.0
    %194 = vmatpush1.msra.mxu0 0.0
    %195 = vmatprep.subr.mxu0 0.0
    %196 = vmatpush1.msra.mxu0 0.0
    %197 = vmatprep.subr.mxu0 0.0
    %198 = vmatpush1.msra.mxu0 0.0
    %199 = vmatprep.subr.mxu0 0.0
    %200 = vmatpush1.msra.mxu0 0.0
    %201 = vmatprep.subr.mxu0 0.0
    %202 = vmatpush1.msra.mxu0 0.0
    %203 = vmatprep.subr.mxu0 0.0
    %204 = vmatpush1.msra.mxu0 0.0
    %205 = vmatprep.subr.mxu0 0.0
    %206 = vmatpush1.msra.mxu0 0.0
    %207 = vmatprep.mubr.f32.mxu0 0.0
    %208 = vmatmul.mubr.f32.gmra.mrb[0].mxu0 %v138
    %v209 = vpop.f32.mrb[0].mxu0
    %v210 = vadd.f32 0.0, %v209
    %v211 = vpop.f32.mrb[0].mxu0
    %212 = vmatprep.mubr.f32.mxu0 0.0
    %213 = vmatmul.mubr.f32.gmra.mrb[0].mxu0 %v141
    %v214 = vpop.f32.mrb[0].mxu0
    %v215 = vadd.f32 0.0, %v214
    %v216 = vpop.f32.mrb[0].mxu0
    %217 = vdwg.mxu0
    %v218 = vadd.f32 %v133, %v210
    %v219 = vadd.f32 %v134, %v215
    %vm220 = vcmask 130048
    %221 = vst.msk [vmem:[#allocation2] sm:$0xff] %vm220, %v218
    %222 = vst.msk [vmem:[#allocation2 + $0x8] sm:$0xff] %vm220, %v219
    %v223 = vld [vmem:[#allocation4] sm:$0x1]
    %v224 = vsel %vm35, %v27, 0.0
    %v225 = vsel %vm35, %v28, 0.0
    %v226 = vadd.f32 %v224, %v225
    %v227 = vsel %vm35, %v29, 0.0
    %v228 = vadd.f32 %v226, %v227
    %v229 = vsel %vm35, %v30, 0.0
    %v230 = vadd.f32 %v228, %v229
    %231 = vadd.xlane.f32.xlu0 %v230
    %v232 = vpop.xlane.xlu0 %231
    %v233 = vrot.slane %v232, 4
    %v234 = vadd.f32 %v232, %v233
    %v235 = vrot.slane %v234, 2
    %v236 = vadd.f32 %v234, %v235
    %v237 = vrot.slane %v236, 1
    %v238 = vadd.f32 %v236, %v237
    %s239 = vtos %v238
    %v240 = vstv %s239
    %v241 = vadd.f32 %v223, %v240
    %vm242 = vcmask 0
    %243 = vst.msk [vmem:[#allocation4] sm:$0x1] %vm242, %v241
    // Predicated region
    $region18: #{tpu_custom_call.1} parent=1 // pred_check
      _
    $region19: #{tpu_custom_call.1} parent=1 // pred_check_branch
      %245 = sbr.rel (0) target = $region21
    $region20: #{tpu_custom_call.1} parent=1 // pred_region
      %s247 = ssub.s32 256, 256
      %248 = vsyncadd [#allocation3], %s247
      %s249 = sshll.u32 [#allocation2], 4
      %s250 = int_to_ptr.vmem [resolvable:$true] %s249
      %255 = dma.vmem_to_hbm [thread:$0]  %s250, 256, %s3, [#allocation3], 128, 128, 8
    $region21: #{tpu_custom_call.1} parent=1 // pred_fallthru
      _
    // Predicated region
    $region22: #{tpu_custom_call.1} parent=1 // pred_check
      _
    $region23: #{tpu_custom_call.1} parent=1 // pred_check_branch
      %257 = sbr.rel (0) target = $region25
    $region24: #{tpu_custom_call.1} parent=1 // pred_region
      %s259 = ssub.s32 16, 16
      %260 = vsyncadd [#allocation5], %s259
      %s262 = sshll.u32 [#allocation4], 4
      %s263 = int_to_ptr.vmem [resolvable:$true] %s262
      %265 = dma.vmem_to_hbm [thread:$0]  %s263, 16, %s4, [#allocation5]
    $region25: #{tpu_custom_call.1} parent=1 // pred_fallthru
      _
    // Predicated region
    $region26: #{tpu_custom_call.1} parent=1 // pred_check
      _
    $region27: #{tpu_custom_call.1} parent=1 // pred_check_branch
      %267 = sbr.rel (0) target = $region29
    $region28: #{tpu_custom_call.1} parent=1 // pred_region
      %268 = dma.done [#allocation3], 256
    $region29: #{tpu_custom_call.1} parent=1 // pred_fallthru
      _
    // Predicated region
    $region30: #{tpu_custom_call.1} parent=1 // pred_check
      _
    $region31: #{tpu_custom_call.1} parent=1 // pred_check_branch
      %270 = sbr.rel (0) target = $region33
    $region32: #{tpu_custom_call.1} parent=1 // pred_region
      %271 = dma.done [#allocation5], 16
    $region33: #{tpu_custom_call.1} parent=1 // pred_fallthru
      _
    %272 = vsyncpa [#allocation3], 1
    %273 = vsyncpa [#allocation5], 1

</llo_original>
